<compile_context>
chip_gen: v7x
topology: tpu7x:2x2x1
jax: 0.10.0
libtpu: 0.0.40
codegen_flags: <defaults>
</compile_context>

<pallas_src>
import functools

import jax
import jax.numpy as jnp
from jax import lax
from jax.experimental import pallas as pl
from jax.experimental.pallas import tpu as pltpu

_LANE = 128


def _round_up(x, m):
    return ((x + m - 1) // m) * m


def _bigram_kernel(*refs, tile_n, vocab, vocab_padded, n_tokens,
                   compute_loss, emit_logits):
    # Unpack refs according to the static kernel variant.
    if compute_loss:
        idx_ref, tgt_ref, table_ref = refs[0], refs[1], refs[2]
        out_refs = refs[3:]
    else:
        idx_ref, table_ref = refs[0], refs[1]
        tgt_ref = None
        out_refs = refs[2:]
    o = 0
    logits_ref = None
    ptok_ref = None
    if emit_logits:
        logits_ref = out_refs[o]
        o += 1
    if compute_loss:
        ptok_ref = out_refs[o]
        o += 1

    idx = idx_ref[...]                                           # (tile_n, 1)
    col = lax.broadcasted_iota(jnp.int32, (tile_n, vocab_padded), 1)

    # Embedding lookup as a one-hot matmul on the MXU.
    one_hot = (col == idx).astype(jnp.float32)                   # (tile_n, Vp)
    logits = jnp.dot(one_hot, table_ref[...],
                     preferred_element_type=jnp.float32)         # (tile_n, Vp)

    if emit_logits:
        logits_ref[...] = logits

    if compute_loss:
        tgt = tgt_ref[...]                                       # (tile_n, 1)
        tgt_one_hot = (col == tgt).astype(jnp.float32)
        picked = jnp.sum(tgt_one_hot * logits, axis=-1, keepdims=True)

        if vocab_padded > vocab:
            # Padded vocab columns must not leak into the logsumexp.
            masked = jnp.where(col < vocab, logits, -jnp.inf)
        else:
            masked = logits
        m = jnp.max(masked, axis=-1, keepdims=True)
        lse = jnp.log(jnp.sum(jnp.exp(masked - m), axis=-1, keepdims=True)) + m
        per_tok = lse - picked                                   # (tile_n, 1)

        # Zero out padded token rows so the wrapper-side mean stays exact.
        row = lax.broadcasted_iota(jnp.int32, (tile_n, 1), 0)
        global_row = pl.program_id(0) * tile_n + row
        valid = (global_row < n_tokens).astype(jnp.float32)
        ptok_ref[...] = per_tok * valid


def bigram_forward(idx, table, targets=None, *, return_logits=True,
                   tile_n=256):
    """Forward pass of the bigram language model.

    Returns (logits, loss):
      * targets given:  logits is (B*T, V) (torch's .view(-1, vocab)) or None
                        if return_logits=False; loss is a scalar.
      * targets is None: logits is (B, T, V); loss is None.
    """
    B, T = idx.shape
    V = table.shape[0]
    N = B * T
    compute_loss = targets is not None
    emit_logits = return_logits or not compute_loss

    Vp = _round_up(V, _LANE)                 # lane-dense vocab axis
    n8 = _round_up(N, 8)
    tile_n = max(8, _round_up(min(tile_n, n8), 8))
    Np = _round_up(N, tile_n)
    grid = (Np // tile_n,)

    table_p = table.astype(jnp.float32)
    if Vp > V:
        table_p = jnp.pad(table_p, ((0, Vp - V), (0, Vp - V)))

    idx_p = jnp.zeros((Np, 1), jnp.int32).at[:N, 0].set(
        idx.reshape(-1).astype(jnp.int32))

    inputs = [idx_p]
    in_specs = [pl.BlockSpec((tile_n, 1), lambda i: (i, 0))]
    if compute_loss:
        tgt_p = jnp.zeros((Np, 1), jnp.int32).at[:N, 0].set(
            targets.reshape(-1).astype(jnp.int32))
        inputs.append(tgt_p)
        in_specs.append(pl.BlockSpec((tile_n, 1), lambda i: (i, 0)))
    inputs.append(table_p)
    in_specs.append(pl.BlockSpec((Vp, Vp), lambda i: (0, 0)))   # table resident

    out_shapes = []
    out_specs = []
    if emit_logits:
        out_shapes.append(jax.ShapeDtypeStruct((Np, Vp), jnp.float32))
        out_specs.append(pl.BlockSpec((tile_n, Vp), lambda i: (i, 0)))
    if compute_loss:
        out_shapes.append(jax.ShapeDtypeStruct((Np, 1), jnp.float32))
        out_specs.append(pl.BlockSpec((tile_n, 1), lambda i: (i, 0)))

    kernel = functools.partial(
        _bigram_kernel, tile_n=tile_n, vocab=V, vocab_padded=Vp,
        n_tokens=N, compute_loss=compute_loss, emit_logits=emit_logits)

    flops = 2 * Np * Vp * Vp
    transcendentals = Np * Vp if compute_loss else 0
    bytes_accessed = (Vp * Vp * 4
                      + Np * 4 * (2 if compute_loss else 1)
                      + (Np * Vp * 4 if emit_logits else 0)
                      + (Np * 4 if compute_loss else 0))

    # Resident table + double-buffered logits / one-hot tiles + small idx/tgt
    # buffers; clamp to stay within v7x's 64 MiB VMEM while keeping
    # double-buffering alive.
    vmem_bytes = (Vp * Vp * 4 + 4 * tile_n * Vp * 4 + 8 * tile_n * 4
                  + (1 << 20))
    vmem_limit = int(min(max(vmem_bytes, 32 * 1024 * 1024),
                         64 * 1024 * 1024))

    outs = pl.pallas_call(
        kernel,
        out_shape=tuple(out_shapes),
        grid=grid,
        in_specs=in_specs,
        out_specs=tuple(out_specs),
        compiler_params=pltpu.CompilerParams(
            dimension_semantics=("parallel",),
            vmem_limit_bytes=vmem_limit),
        cost_estimate=pl.CostEstimate(
            flops=flops,
            transcendentals=transcendentals,
            bytes_accessed=bytes_accessed),
    )(*inputs)

    o = 0
    logits = None
    if emit_logits:
        logits = outs[o][:N, :V]
        o += 1
    loss = None
    if compute_loss:
        per_tok = outs[o][:N, 0]
        loss = jnp.sum(per_tok) / N

    if not compute_loss:
        return logits.reshape(B, T, V), None
    return logits, loss


def _reference_forward(idx, table, targets):
    # Pure-JAX reference mirroring the PyTorch forward.
    logits = table[idx]                                   # (B, T, V)
    V = logits.shape[-1]
    logits = logits.reshape(-1, V)
    tgt = targets.reshape(-1)
    lse = jax.nn.logsumexp(logits, axis=-1)
    picked = jnp.take_along_axis(logits, tgt[:, None], axis=-1)[:, 0]
    return logits, jnp.mean(lse - picked)


if __name__ == "__main__":
    vocab_size = 65          # realistic char vocab -> exercises the V->128 padding
    batch, context = 2, 8

    key = jax.random.PRNGKey(0)
    k_tab, k_idx, k_tgt = jax.random.split(key, 3)

    # nn.Embedding default init: N(0, 1)
    table = jax.random.normal(k_tab, (vocab_size, vocab_size), dtype=jnp.float32)
    idx = jax.random.randint(k_idx, (batch, context), 0, vocab_size,
                             dtype=jnp.int32)
    targets = jax.random.randint(k_tgt, (batch, context), 0, vocab_size,
                                 dtype=jnp.int32)

    ref_logits, ref_loss = _reference_forward(idx, table, targets)

    # Training path: logits (B*T, V) + scalar loss.
    logits, loss = bigram_forward(idx, table, targets)
    jax.block_until_ready((logits, loss))
    assert logits.shape == (batch * context, vocab_size)
    assert jnp.allclose(logits, ref_logits, atol=1e-5)
    assert jnp.allclose(loss, ref_loss, atol=1e-5, rtol=1e-5)

    # Same result when the token axis is split over a grid > 1.
    logits2, loss2 = bigram_forward(idx, table, targets, tile_n=8)
    jax.block_until_ready((logits2, loss2))
    assert jnp.allclose(logits2, ref_logits, atol=1e-5)
    assert jnp.allclose(loss2, ref_loss, atol=1e-5, rtol=1e-5)

    # Loss-only path: logits HBM writeback is compiled out entirely.
    logits3, loss3 = bigram_forward(idx, table, targets, return_logits=False)
    jax.block_until_ready(loss3)
    assert logits3 is None
    assert jnp.allclose(loss3, ref_loss, atol=1e-5, rtol=1e-5)

    # Inference path: no targets, CE block compiled out, logits (B, T, V).
    logits4, loss4 = bigram_forward(idx, table, None)
    jax.block_until_ready(logits4)
    assert logits4.shape == (batch, context, vocab_size)
    assert loss4 is None
    assert jnp.allclose(logits4.reshape(-1, vocab_size), ref_logits, atol=1e-5)

    print("KERNEL_OK")
</pallas_src>

<mosaic_0001>
module attributes {stable_mosaic.version = 11 : i64} {
  func.func @_bigram_kernel(%arg0: i32, %arg1: memref<16x1xi32, #tpu.memory_space<vmem>>, %arg2: memref<16x1xi32, #tpu.memory_space<vmem>>, %arg3: memref<128x128xf32, #tpu.memory_space<vmem>>, %arg4: memref<16x128xf32, #tpu.memory_space<vmem>>, %arg5: memref<16x1xf32, #tpu.memory_space<vmem>>) attributes {dimension_semantics = [#tpu.dimension_semantics<parallel>], iteration_bounds = array<i64: 1>, scalar_prefetch = 0 : i64, scratch_operands = 0 : i64, tpu.core_type = #tpu.core_type<tc>, window_params = [{transform_indices = @transform_0, window_bounds = array<i64: 16, 1>}, {transform_indices = @transform_1, window_bounds = array<i64: 16, 1>}, {pipeline_mode = #tpu.pipeline_mode<synchronous>, transform_indices = @transform_2, window_bounds = array<i64: 128, 128>}, {transform_indices = @transform_3, window_bounds = array<i64: 16, 128>}, {transform_indices = @transform_4, window_bounds = array<i64: 16, 1>}]} {
    %c0 = arith.constant 0 : index
    %c0_0 = arith.constant 0 : index
    %0 = vector.load %arg1[%c0, %c0_0] : memref<16x1xi32, #tpu.memory_space<vmem>>, vector<16x1xi32>
    %1 = tpu.iota {dimensions = array<i32: 1>} : vector<16x128xi32>
    %2 = vector.broadcast %0 : vector<16x1xi32> to vector<16x128xi32>
    %3 = arith.cmpi eq, %1, %2 : vector<16x128xi32>
    %4 = arith.extui %3 : vector<16x128xi1> to vector<16x128xi32>
    %5 = arith.sitofp %4 : vector<16x128xi32> to vector<16x128xf32>
    %c0_1 = arith.constant 0 : index
    %c0_2 = arith.constant 0 : index
    %6 = vector.load %arg3[%c0_1, %c0_2] : memref<128x128xf32, #tpu.memory_space<vmem>>, vector<128x128xf32>
    %cst = arith.constant dense<0.000000e+00> : vector<16x128xf32>
    %7 = tpu.matmul %5, %6, %cst {dimension_numbers = #tpu.dot_dimension_numbers<[1], [0], [0], [1], [0, 0, 1, 1], [], []>} : vector<16x128xf32>, vector<128x128xf32>, vector<16x128xf32> -> vector<16x128xf32>
    %c0_3 = arith.constant 0 : index
    %c0_4 = arith.constant 0 : index
    %8 = vector.load %arg4[%c0_3, %c0_4] : memref<16x128xf32, #tpu.memory_space<vmem>>, vector<16x128xf32>
    tpu.vector_store %arg4[%c0_3, %c0_4], %7 {strides = array<i32>} : memref<16x128xf32, #tpu.memory_space<vmem>>, vector<16x128xf32>,
    %c0_5 = arith.constant 0 : index
    %c0_6 = arith.constant 0 : index
    %9 = vector.load %arg2[%c0_5, %c0_6] : memref<16x1xi32, #tpu.memory_space<vmem>>, vector<16x1xi32>
    %10 = vector.broadcast %9 : vector<16x1xi32> to vector<16x128xi32>
    %11 = arith.cmpi eq, %1, %10 : vector<16x128xi32>
    %12 = arith.extui %11 : vector<16x128xi1> to vector<16x128xi32>
    %13 = arith.sitofp %12 : vector<16x128xi32> to vector<16x128xf32>
    %14 = arith.mulf %13, %7 : vector<16x128xf32>
    %cst_7 = arith.constant dense<0.000000e+00> : vector<16xf32>
    %15 = vector.multi_reduction <add>, %14, %cst_7 [1] : vector<16x128xf32> to vector<16xf32>
    %16 = vector.shape_cast %15 : vector<16xf32> to vector<16x1xf32>
    %c65_i32 = arith.constant 65 : i32
    %17 = vector.broadcast %c65_i32 : i32 to vector<16x128xi32>
    %18 = arith.cmpi slt, %1, %17 : vector<16x128xi32>
    %cst_8 = arith.constant 0xFF800000 : f32
    %19 = vector.broadcast %cst_8 : f32 to vector<16x128xf32>
    %20 = arith.select %18, %7, %19 : vector<16x128xi1>, vector<16x128xf32>
    %cst_9 = arith.constant dense<0xFF800000> : vector<16xf32>
    %21 = vector.multi_reduction <maximumf>, %20, %cst_9 [1] : vector<16x128xf32> to vector<16xf32>
    %22 = vector.shape_cast %21 : vector<16xf32> to vector<16x1xf32>
    %23 = vector.broadcast %22 : vector<16x1xf32> to vector<16x128xf32>
    %24 = arith.subf %20, %23 : vector<16x128xf32>
    %25 = math.exp %24 : vector<16x128xf32>
    %cst_10 = arith.constant dense<0.000000e+00> : vector<16xf32>
    %26 = vector.multi_reduction <add>, %25, %cst_10 [1] : vector<16x128xf32> to vector<16xf32>
    %27 = vector.shape_cast %26 : vector<16xf32> to vector<16x1xf32>
    %28 = math.log %27 : vector<16x1xf32>
    %29 = arith.addf %28, %22 : vector<16x1xf32>
    %30 = arith.subf %29, %16 : vector<16x1xf32>
    %31 = tpu.iota {dimensions = array<i32: 0>} : vector<16x1xi32>
    %c16_i32 = arith.constant 16 : i32
    %32 = arith.muli %arg0, %c16_i32 : i32
    %33 = vector.broadcast %32 : i32 to vector<16x1xi32>
    %34 = arith.addi %33, %31 : vector<16x1xi32>
    %c16_i32_11 = arith.constant 16 : i32
    %35 = vector.broadcast %c16_i32_11 : i32 to vector<16x1xi32>
    %36 = arith.cmpi slt, %34, %35 : vector<16x1xi32>
    %37 = arith.extui %36 : vector<16x1xi1> to vector<16x1xi32>
    %38 = arith.sitofp %37 : vector<16x1xi32> to vector<16x1xf32>
    %39 = arith.mulf %30, %38 : vector<16x1xf32>
    %c0_12 = arith.constant 0 : index
    %c0_13 = arith.constant 0 : index
    %40 = vector.load %arg5[%c0_12, %c0_13] : memref<16x1xf32, #tpu.memory_space<vmem>>, vector<16x1xf32>
    tpu.vector_store %arg5[%c0_12, %c0_13], %39 {strides = array<i32>} : memref<16x1xf32, #tpu.memory_space<vmem>>, vector<16x1xf32>,
    return
  }
  func.func @transform_0(%arg0: i32) -> (i32, i32) {
    %c0_i32 = arith.constant 0 : i32
    %c0_i32_0 = arith.constant 0 : i32
    return %arg0, %c0_i32 : i32, i32
  }
  func.func @transform_1(%arg0: i32) -> (i32, i32) {
    %c0_i32 = arith.constant 0 : i32
    %c0_i32_0 = arith.constant 0 : i32
    return %arg0, %c0_i32 : i32, i32
  }
  func.func @transform_2(%arg0: i32) -> (i32, i32) {
    %c0_i32 = arith.constant 0 : i32
    %c0_i32_0 = arith.constant 0 : i32
    %c0_i32_1 = arith.constant 0 : i32
    return %c0_i32, %c0_i32_0 : i32, i32
  }
  func.func @transform_3(%arg0: i32) -> (i32, i32) {
    %c0_i32 = arith.constant 0 : i32
    %c0_i32_0 = arith.constant 0 : i32
    return %arg0, %c0_i32 : i32, i32
  }
  func.func @transform_4(%arg0: i32) -> (i32, i32) {
    %c0_i32 = arith.constant 0 : i32
    %c0_i32_0 = arith.constant 0 : i32
    return %arg0, %c0_i32 : i32, i32
  }
}

</mosaic_0001>

<llo_original>
// kernel: tpu_custom_call.1
$region0: #{tpu_custom_call.1}
  #allocation0 [shape = 'u32[]', space=smem, size = 0x4, offset = 0x4, fixed_abs, tag = 'smem constant byte address 0x4 - core index']
  #allocation1 [shape = 'u32[144,128]{1,0:T(1,128)}', space=vmem, size = 0x12000, scoped, tag = 'internal scratch']
  %s0 = inlined_call_operand.vmem [shape: s32[16,1], index: 0, kind: input, shape index: {}]
  %s1 = inlined_call_operand.vmem [shape: s32[16,1], index: 1, kind: input, shape index: {}]
  %s2 = inlined_call_operand.hbm [shape: f32[128,128], index: 2, kind: input, shape index: {}]
  %s3 = inlined_call_operand.hbm [shape: f32[16,128], index: 3, kind: output, shape index: {0}]
  %s4 = inlined_call_operand.vmem [shape: f32[16,1], index: 4, kind: output, shape index: {1}]
  %5 = xla_tuple %s3, %s4
  %s6 = sld [smem:[#allocation0]]
  $region34: #{tpu_custom_call.1} parent=0
    _
  %s8 = ssub.s32 1, %s6
  %s9 = scalar_select 0, %s8, %s6
  $region1: #{tpu_custom_call.1} parent=0
    #allocation2 [shape = 'u8[65536]{0}', space=vmem, size = 0x10000, scoped, tag = 'input window, operand 2, single buffered']
    #allocation3 [shape = 's32[1]{0}', space=sflag, size = 0x4, scoped, tag = 'scoped memory for tpu_custom_call.1']
    #allocation4 [shape = 's32[1]{0}', space=sflag, size = 0x4, scoped, tag = 'scoped memory for tpu_custom_call.1']
    #allocation5 [shape = 'u8[8192]{0}', space=vmem, size = 0x2000, scoped, tag = 'output window, operand 0, single buffered']
    %10 = vsyncpa [#allocation3], 0
    %11 = vsyncpa [#allocation4], 0
    // Predicated region
    $region2: #{tpu_custom_call.1} parent=1 // pred_check
      _
    $region3: #{tpu_custom_call.1} parent=1 // pred_check_branch
      %13 = sbr.rel (0) target = $region5
    $region4: #{tpu_custom_call.1} parent=1 // pred_region
      _
    $region5: #{tpu_custom_call.1} parent=1 // pred_fallthru
      _
    // Predicated region
    $region6: #{tpu_custom_call.1} parent=1 // pred_check
      _
    $region7: #{tpu_custom_call.1} parent=1 // pred_check_branch
      %15 = sbr.rel (0) target = $region9
    $region8: #{tpu_custom_call.1} parent=1 // pred_region
      _
    $region9: #{tpu_custom_call.1} parent=1 // pred_fallthru
      _
    // Predicated region
    $region10: #{tpu_custom_call.1} parent=1 // pred_check
      _
    $region11: #{tpu_custom_call.1} parent=1 // pred_check_branch
      %17 = sbr.rel (0) target = $region13
    $region12: #{tpu_custom_call.1} parent=1 // pred_region
      %s19 = ssub.s32 2048, 2048
      %20 = vsyncadd [#allocation3], %s19
      %s21 = sshll.u32 [#allocation2], 4
      %s22 = int_to_ptr.vmem [resolvable:$true] %s21
      %27 = dma.hbm_to_vmem [thread:$0]  %s2, 2048, %s22, [#allocation3], 128, 128, 8
    $region13: #{tpu_custom_call.1} parent=1 // pred_fallthru
      _
    // Predicated region
    $region14: #{tpu_custom_call.1} parent=1 // pred_check
      _
    $region15: #{tpu_custom_call.1} parent=1 // pred_check_branch
      %29 = sbr.rel (0) target = $region17
    $region16: #{tpu_custom_call.1} parent=1 // pred_region
      %30 = dma.done [#allocation3], 2048
    $region17: #{tpu_custom_call.1} parent=1 // pred_fallthru
      _
    %v31 = vld [vmem:[%s0] sm:$0xff]
    %v32 = vld [vmem:[%s0 + $0x8] sm:$0xff]
    %v33 = vlaneseq
    %v34 = vand.u32 %v33, 127
    %35 = vset.pattern.permute.xlu0 0
    %36 = vperm.xlu0 %35, %v31
    %v37 = vpop.permute.xlu0 %36
    %38 = vset.pattern.permute.xlu0 0
    %39 = vperm.xlu0 %38, %v32
    %v40 = vpop.permute.xlu0 %39
    %vm41 = vcmp.eq.s32.totalorder %v34, %v37
    %vm42 = vcmp.eq.s32.totalorder %v34, %v40
    %v43 = vsel %vm41, 1, 0
    %v44 = vsel %vm42, 1, 0
    %v45 = vcvt.s32.f32 %v43
    %v46 = vcvt.s32.f32 %v44
    %v47 = vld [vmem:[#allocation2] sm:$0xff]
    %v48 = vld [vmem:[#allocation2 + $0x8] sm:$0xff]
    %v49 = vld [vmem:[#allocation2 + $0x10] sm:$0xff]
    %v50 = vld [vmem:[#allocation2 + $0x18] sm:$0xff]
    %v51 = vld [vmem:[#allocation2 + $0x20] sm:$0xff]
    %v52 = vld [vmem:[#allocation2 + $0x28] sm:$0xff]
    %v53 = vld [vmem:[#allocation2 + $0x30] sm:$0xff]
    %v54 = vld [vmem:[#allocation2 + $0x38] sm:$0xff]
    %v55 = vld [vmem:[#allocation2 + $0x40] sm:$0xff]
    %v56 = vld [vmem:[#allocation2 + $0x48] sm:$0xff]
    %v57 = vld [vmem:[#allocation2 + $0x50] sm:$0xff]
    %v58 = vld [vmem:[#allocation2 + $0x58] sm:$0xff]
    %v59 = vld [vmem:[#allocation2 + $0x60] sm:$0xff]
    %v60 = vld [vmem:[#allocation2 + $0x68] sm:$0xff]
    %v61 = vld [vmem:[#allocation2 + $0x70] sm:$0xff]
    %v62 = vld [vmem:[#allocation2 + $0x78] sm:$0xff]
    %63 = vmatprep.subr.mxu0 0.0
    %64 = vmatpush1.msra.mxu0 %v47
    %65 = vmatprep.subr.mxu0 0.0
    %66 = vmatpush1.msra.mxu0 %v48
    %67 = vmatprep.subr.mxu0 0.0
    %68 = vmatpush1.msra.mxu0 %v49
    %69 = vmatprep.subr.mxu0 0.0
    %70 = vmatpush1.msra.mxu0 %v50
    %71 = vmatprep.subr.mxu0 0.0
    %72 = vmatpush1.msra.mxu0 %v51
    %73 = vmatprep.subr.mxu0 0.0
    %74 = vmatpush1.msra.mxu0 %v52
    %75 = vmatprep.subr.mxu0 0.0
    %76 = vmatpush1.msra.mxu0 %v53
    %77 = vmatprep.subr.mxu0 0.0
    %78 = vmatpush1.msra.mxu0 %v54
    %79 = vmatprep.subr.mxu0 0.0
    %80 = vmatpush1.msra.mxu0 %v55
    %81 = vmatprep.subr.mxu0 0.0
    %82 = vmatpush1.msra.mxu0 %v56
    %83 = vmatprep.subr.mxu0 0.0
    %84 = vmatpush1.msra.mxu0 %v57
    %85 = vmatprep.subr.mxu0 0.0
    %86 = vmatpush1.msra.mxu0 %v58
    %87 = vmatprep.subr.mxu0 0.0
    %88 = vmatpush1.msra.mxu0 %v59
    %89 = vmatprep.subr.mxu0 0.0
    %90 = vmatpush1.msra.mxu0 %v60
    %91 = vmatprep.subr.mxu0 0.0
    %92 = vmatpush1.msra.mxu0 %v61
    %93 = vmatprep.subr.mxu0 0.0
    %94 = vmatpush1.msra.mxu0 %v62
    %95 = vmatprep.subr.mxu0 0.0
    %96 = vmatpush1.msra.mxu0 0.0
    %97 = vmatprep.subr.mxu0 0.0
    %98 = vmatpush1.msra.mxu0 0.0
    %99 = vmatprep.subr.mxu0 0.0
    %100 = vmatpush1.msra.mxu0 0.0
    %101 = vmatprep.subr.mxu0 0.0
    %102 = vmatpush1.msra.mxu0 0.0
    %103 = vmatprep.subr.mxu0 0.0
    %104 = vmatpush1.msra.mxu0 0.0
    %105 = vmatprep.subr.mxu0 0.0
    %106 = vmatpush1.msra.mxu0 0.0
    %107 = vmatprep.subr.mxu0 0.0
    %108 = vmatpush1.msra.mxu0 0.0
    %109 = vmatprep.subr.mxu0 0.0
    %110 = vmatpush1.msra.mxu0 0.0
    %111 = vmatprep.subr.mxu0 0.0
    %112 = vmatpush1.msra.mxu0 0.0
    %113 = vmatprep.subr.mxu0 0.0
    %114 = vmatpush1.msra.mxu0 0.0
    %115 = vmatprep.subr.mxu0 0.0
    %116 = vmatpush1.msra.mxu0 0.0
    %117 = vmatprep.subr.mxu0 0.0
    %118 = vmatpush1.msra.mxu0 0.0
    %119 = vmatprep.subr.mxu0 0.0
    %120 = vmatpush1.msra.mxu0 0.0
    %121 = vmatprep.subr.mxu0 0.0
    %122 = vmatpush1.msra.mxu0 0.0
    %123 = vmatprep.subr.mxu0 0.0
    %124 = vmatpush1.msra.mxu0 0.0
    %125 = vmatprep.subr.mxu0 0.0
    %126 = vmatpush1.msra.mxu0 0.0
    %127 = vmatprep.mubr.f32.mxu0 0.0
    %128 = vmatmul.mubr.f32.gmra.mrb[0].mxu0 %v45
    %v129 = vpop.f32.mrb[0].mxu0
    %v130 = vadd.f32 0.0, %v129
    %v131 = vpop.f32.mrb[0].mxu0
    %132 = vmatprep.mubr.f32.mxu0 0.0
    %133 = vmatmul.mubr.f32.gmra.mrb[0].mxu0 %v46
    %v134 = vpop.f32.mrb[0].mxu0
    %v135 = vadd.f32 0.0, %v134
    %v136 = vpop.f32.mrb[0].mxu0
    %137 = vdwg.mxu0
    %138 = vst [vmem:[#allocation5] sm:$0xff] %v130
    %139 = vst [vmem:[#allocation5 + $0x8] sm:$0xff] %v135
    %v140 = vld [vmem:[%s1] sm:$0xff]
    %v141 = vld [vmem:[%s1 + $0x8] sm:$0xff]
    %142 = vset.pattern.permute.xlu0 0
    %143 = vperm.xlu0 %142, %v140
    %v144 = vpop.permute.xlu0 %143
    %145 = vset.pattern.permute.xlu0 0
    %146 = vperm.xlu0 %145, %v141
    %v147 = vpop.permute.xlu0 %146
    %vm148 = vcmp.eq.s32.totalorder %v34, %v144
    %vm149 = vcmp.eq.s32.totalorder %v34, %v147
    %v150 = vsel %vm148, 1, 0
    %v151 = vsel %vm149, 1, 0
    %v152 = vcvt.s32.f32 %v150
    %v153 = vcvt.s32.f32 %v151
    %v154 = vmul.f32 %v152, %v130
    %v155 = vmul.f32 %v153, %v135
    %156 = vadd.xlane.f32.xlu0 %v154
    %v157 = vpop.xlane.xlu0 %156
    %158 = vadd.xlane.f32.xlu0 %v155
    %v159 = vpop.xlane.xlu0 %158
    %vm160 = vcmp.lt.s32.totalorder %v34, 65
    %v161 = vsel %vm160, %v130, -inf
    %v162 = vsel %vm160, %v135, -inf
    %163 = vmax.xlane.f32.xlu0 %v161
    %v164 = vpop.xlane.xlu0 %163
    %165 = vmax.xlane.f32.xlu0 %v162
    %v166 = vpop.xlane.xlu0 %165
    %v167 = vsub.f32 %v161, %v164
    %v168 = vsub.f32 %v162, %v166
    %v169 = vmul.f32 %v167, 1.442695
    %v170 = vpow.pop %v169
    %v171 = vmul.f32 %v168, 1.442695
    %v172 = vpow.pop %v171
    %173 = vadd.xlane.f32.xlu0 %v170
    %v174 = vpop.xlane.xlu0 %173
    %175 = vadd.xlane.f32.xlu0 %v172
    %v176 = vpop.xlane.xlu0 %175
    %v177 = vlog2.pop %v174
    %v178 = vmul.f32 %v177, 0.6931472
    %v179 = vlog2.pop %v176
    %v180 = vmul.f32 %v179, 0.6931472
    %v181 = vadd.f32 %v178, %v164
    %v182 = vadd.f32 %v180, %v166
    %v183 = vsub.f32 %v181, %v157
    %v184 = vsub.f32 %v182, %v159
    %v185 = vlaneseq
    %v186 = vshrl.u32 %v185, 7
    %v187 = vadd.s32 %v186, 8
    %s188 = smul.u32 0, 16
    %v189 = vstv %s188
    %v190 = vadd.s32 %v189, %v186
    %v191 = vadd.s32 %v189, %v187
    %vm192 = vcmp.lt.s32.totalorder %v190, 16
    %vm193 = vcmp.lt.s32.totalorder %v191, 16
    %v194 = vsel %vm192, 1, 0
    %v195 = vsel %vm193, 1, 0
    %v196 = vcvt.s32.f32 %v194
    %v197 = vcvt.s32.f32 %v195
    %v198 = vmul.f32 %v183, %v196
    %v199 = vmul.f32 %v184, %v197
    %vm200 = vcmask 7168
    %201 = vst.msk [vmem:[%s4] sm:$0xff] %vm200, %v198
    %202 = vst.msk [vmem:[%s4 + $0x8] sm:$0xff] %vm200, %v199
    // Predicated region
    $region18: #{tpu_custom_call.1} parent=1 // pred_check
      _
    $region19: #{tpu_custom_call.1} parent=1 // pred_check_branch
      %204 = sbr.rel (0) target = $region21
    $region20: #{tpu_custom_call.1} parent=1 // pred_region
      %s206 = ssub.s32 256, 256
      %207 = vsyncadd [#allocation4], %s206
      %s208 = sshll.u32 [#allocation5], 4
      %s209 = int_to_ptr.vmem [resolvable:$true] %s208
      %214 = dma.vmem_to_hbm [thread:$0]  %s209, 256, %s3, [#allocation4], 128, 128, 8
    $region21: #{tpu_custom_call.1} parent=1 // pred_fallthru
      _
    // Predicated region
    $region22: #{tpu_custom_call.1} parent=1 // pred_check
      _
    $region23: #{tpu_custom_call.1} parent=1 // pred_check_branch
      %216 = sbr.rel (0) target = $region25
    $region24: #{tpu_custom_call.1} parent=1 // pred_region
      _
    $region25: #{tpu_custom_call.1} parent=1 // pred_fallthru
      _
    // Predicated region
    $region26: #{tpu_custom_call.1} parent=1 // pred_check
      _
    $region27: #{tpu_custom_call.1} parent=1 // pred_check_branch
      %218 = sbr.rel (0) target = $region29
    $region28: #{tpu_custom_call.1} parent=1 // pred_region
      %219 = dma.done [#allocation4], 256
    $region29: #{tpu_custom_call.1} parent=1 // pred_fallthru
      _
    // Predicated region
    $region30: #{tpu_custom_call.1} parent=1 // pred_check
      _
    $region31: #{tpu_custom_call.1} parent=1 // pred_check_branch
      %221 = sbr.rel (0) target = $region33
    $region32: #{tpu_custom_call.1} parent=1 // pred_region
      _
    $region33: #{tpu_custom_call.1} parent=1 // pred_fallthru
      _
    %222 = vsyncpa [#allocation3], 1
    %223 = vsyncpa [#allocation4], 1

</llo_original>
